<compile_context>
chip_gen: v7x
topology: tpu7x:2x2x1
jax: 0.10.0
libtpu: 0.0.40
codegen_flags: <defaults>
</compile_context>

<pallas_src>
import functools

import jax
import jax.numpy as jnp
from jax.experimental import pallas as pl
from jax.experimental.pallas import tpu as pltpu

COEF = 0.97  # matches flipped_filter = [-coef, 1.0]


def _preemphasis_kernel(x_ref, o_ref, carry_ref, *, coef):
    ti = pl.program_id(1)            # time-tile index (sequential axis)
    x = x_ref[...]                   # (tile_b, tile_t) tile in VMEM

    # First T tile of a row-block: carry <- reflect-pad value x[:, 1].
    @pl.when(ti == 0)
    def _():
        carry_ref[...] = x[:, 1:2]

    left = carry_ref[...]            # (tile_b, 1): column left of this tile

    # prev[:, t] = x[:, t-1]; column 0 wraps and is fixed up below.
    prev = pltpu.roll(x, shift=1, axis=1)

    # Full-width, lane-dense store + narrow boundary fix-up.
    o_ref[...] = x - coef * prev
    o_ref[:, 0:1] = x[:, 0:1] - coef * left

    # Carry this tile's last column into the next T tile.
    carry_ref[...] = x[:, -1:]


def preemphasis(x: jax.Array, *, coef: float = COEF,
                block_bytes: int = 4 << 20,
                target_tile_t: int = 32768) -> jax.Array:
    """y[:, t] = x[:, t] - coef * x[:, t-1] (left reflect pad) over (B, T)."""
    B, T = x.shape
    assert T >= 2, "reflect padding needs at least 2 samples (same as PyTorch)"
    itemsize = jnp.dtype(x.dtype).itemsize

    # Dtype-aware minimum sublane tile: 8 (f32) / 16 (bf16) / 32 (int8/fp8).
    sub = max(8, 32 // itemsize)
    t_full = pl.cdiv(T, 128) * 128
    b_full = pl.cdiv(B, sub) * sub

    # Lane axis first: big, 128-aligned, but never beyond (rounded-up) T.
    tile_t = max(128, (min(target_tile_t, t_full) // 128) * 128)
    # Fill remaining per-block byte budget with rows (sublane-aligned).
    tile_b = max(sub, (block_bytes // (tile_t * itemsize)) // sub * sub)
    tile_b = min(tile_b, b_full)
    # Keep >=2 blocks on the parallel B axis when possible (v7x: 2 TensorCores).
    if tile_b >= b_full and b_full >= 2 * sub:
        tile_b = pl.cdiv(pl.cdiv(b_full, 2), sub) * sub

    grid = (pl.cdiv(B, tile_b), pl.cdiv(T, tile_t))

    return pl.pallas_call(
        functools.partial(_preemphasis_kernel, coef=coef),
        out_shape=jax.ShapeDtypeStruct((B, T), x.dtype),
        grid_spec=pltpu.PrefetchScalarGridSpec(
            num_scalar_prefetch=0,
            grid=grid,
            in_specs=[pl.BlockSpec((tile_b, tile_t), lambda bi, ti: (bi, ti))],
            out_specs=pl.BlockSpec((tile_b, tile_t), lambda bi, ti: (bi, ti)),
            scratch_shapes=[pltpu.VMEM((tile_b, 1), x.dtype)],
        ),
        compiler_params=pltpu.CompilerParams(
            dimension_semantics=("parallel", "arbitrary"),
            vmem_limit_bytes=48 << 20),
        cost_estimate=pl.CostEstimate(
            flops=2 * B * T,
            transcendentals=0,
            bytes_accessed=2 * B * T * itemsize),
    )(x)


def preemphasis_ref(x: jax.Array, coef: float = COEF) -> jax.Array:
    # Pure-JAX reference mirroring the PyTorch module (reflect pad + conv1d).
    padded = jnp.concatenate([x[:, 1:2], x], axis=-1)
    return padded[:, 1:] - coef * padded[:, :-1]


if __name__ == "__main__":
    key = jax.random.PRNGKey(0)
    k1, k2, k3 = jax.random.split(key, 3)

    # Aligned case: (8, 2048); small tile_t forces grid (1, 4) and exercises
    # the cross-tile carry path.
    x1 = jax.random.normal(k1, (8, 2048), dtype=jnp.float32)
    y1 = preemphasis(x1, target_tile_t=512)
    jax.block_until_ready(y1)
    assert y1.shape == x1.shape and y1.dtype == x1.dtype
    assert jnp.allclose(y1, preemphasis_ref(x1), atol=1e-6, rtol=1e-6)

    # Ragged case, no wrapper pad/slice: (4, 1000) -> partial edge blocks are
    # clipped in-kernel by Pallas.
    x2 = jax.random.normal(k2, (4, 1000), dtype=jnp.float32)
    y2 = preemphasis(x2, target_tile_t=512)
    jax.block_until_ready(y2)
    assert y2.shape == x2.shape
    assert jnp.allclose(y2, preemphasis_ref(x2), atol=1e-6, rtol=1e-6)

    # Both grid axes > 1 with partial blocks on each axis: (20, 640) with a
    # tiny byte budget -> tile_b=8, tile_t=256, grid (3, 3); carry resets at
    # ti==0 of every B block.
    x3 = jax.random.normal(k3, (20, 640), dtype=jnp.float32)
    y3 = preemphasis(x3, block_bytes=8 * 1024, target_tile_t=256)
    jax.block_until_ready(y3)
    assert y3.shape == x3.shape
    assert jnp.allclose(y3, preemphasis_ref(x3), atol=1e-6, rtol=1e-6)

    # Default big-tile path (tiles clamp to the full small shape here).
    y1d = preemphasis(x1)
    jax.block_until_ready(y1d)
    assert jnp.allclose(y1d, preemphasis_ref(x1), atol=1e-6, rtol=1e-6)

    print("KERNEL_OK")
</pallas_src>

<mosaic_0001>
module attributes {stable_mosaic.version = 11 : i64} {
  func.func @_preemphasis_kernel(%arg0: i32, %arg1: i32, %arg2: memref<8x512xf32, #tpu.memory_space<vmem>>, %arg3: memref<8x512xf32, #tpu.memory_space<vmem>>, %arg4: memref<8x1xf32, #tpu.memory_space<vmem>>) attributes {dimension_semantics = [#tpu.dimension_semantics<parallel>, #tpu.dimension_semantics<arbitrary>], iteration_bounds = array<i64: 1, 4>, scalar_prefetch = 0 : i64, scratch_operands = 1 : i64, tpu.core_type = #tpu.core_type<tc>, window_params = [{transform_indices = @transform_0, window_bounds = array<i64: 8, 512>}, {transform_indices = @transform_1, window_bounds = array<i64: 8, 512>}]} {
    %c0 = arith.constant 0 : index
    %c0_0 = arith.constant 0 : index
    %0 = vector.load %arg2[%c0, %c0_0] : memref<8x512xf32, #tpu.memory_space<vmem>>, vector<8x512xf32>
    %c0_i32 = arith.constant 0 : i32
    %1 = arith.cmpi eq, %arg1, %c0_i32 : i32
    %2 = arith.extui %1 : i1 to i32
    %c0_i32_1 = arith.constant 0 : i32
    %3 = arith.cmpi ne, %2, %c0_i32_1 : i32
    scf.if %3 {
      %17 = vector.extract_strided_slice %0 {offsets = [0, 1], sizes = [8, 1], strides = [1, 1]} : vector<8x512xf32> to vector<8x1xf32>
      %c0_11 = arith.constant 0 : index
      %c0_12 = arith.constant 0 : index
      %18 = vector.load %arg4[%c0_11, %c0_12] : memref<8x1xf32, #tpu.memory_space<vmem>>, vector<8x1xf32>
      tpu.vector_store %arg4[%c0_11, %c0_12], %17 {strides = array<i32>} : memref<8x1xf32, #tpu.memory_space<vmem>>, vector<8x1xf32>,
    } else {
    }
    %c0_2 = arith.constant 0 : index
    %c0_3 = arith.constant 0 : index
    %4 = vector.load %arg4[%c0_2, %c0_3] : memref<8x1xf32, #tpu.memory_space<vmem>>, vector<8x1xf32>
    %c1_i32 = arith.constant 1 : i32
    %5 = tpu.dynamic_rotate %0 by %c1_i32 dim 1 : vector<8x512xf32>, i32 -> vector<8x512xf32>
    %cst = arith.constant 9.700000e-01 : f32
    %6 = vector.broadcast %cst : f32 to vector<8x512xf32>
    %7 = arith.mulf %6, %5 : vector<8x512xf32>
    %8 = arith.subf %0, %7 : vector<8x512xf32>
    %c0_4 = arith.constant 0 : index
    %c0_5 = arith.constant 0 : index
    %9 = vector.load %arg3[%c0_4, %c0_5] : memref<8x512xf32, #tpu.memory_space<vmem>>, vector<8x512xf32>
    tpu.vector_store %arg3[%c0_4, %c0_5], %8 {strides = array<i32>} : memref<8x512xf32, #tpu.memory_space<vmem>>, vector<8x512xf32>,
    %10 = vector.extract_strided_slice %0 {offsets = [0, 0], sizes = [8, 1], strides = [1, 1]} : vector<8x512xf32> to vector<8x1xf32>
    %cst_6 = arith.constant 9.700000e-01 : f32
    %11 = vector.broadcast %cst_6 : f32 to vector<8x1xf32>
    %12 = arith.mulf %11, %4 : vector<8x1xf32>
    %13 = arith.subf %10, %12 : vector<8x1xf32>
    %c0_7 = arith.constant 0 : index
    %c0_8 = arith.constant 0 : index
    %14 = vector.load %arg3[%c0_7, %c0_8] : memref<8x512xf32, #tpu.memory_space<vmem>>, vector<8x1xf32>
    tpu.vector_store %arg3[%c0_7, %c0_8], %13 {strides = array<i32>} : memref<8x512xf32, #tpu.memory_space<vmem>>, vector<8x1xf32>,
    %15 = vector.extract_strided_slice %0 {offsets = [0, 511], sizes = [8, 1], strides = [1, 1]} : vector<8x512xf32> to vector<8x1xf32>
    %c0_9 = arith.constant 0 : index
    %c0_10 = arith.constant 0 : index
    %16 = vector.load %arg4[%c0_9, %c0_10] : memref<8x1xf32, #tpu.memory_space<vmem>>, vector<8x1xf32>
    tpu.vector_store %arg4[%c0_9, %c0_10], %15 {strides = array<i32>} : memref<8x1xf32, #tpu.memory_space<vmem>>, vector<8x1xf32>,
    return
  }
  func.func @transform_0(%arg0: i32, %arg1: i32) -> (i32, i32) {
    %c0_i32 = arith.constant 0 : i32
    return %arg0, %arg1 : i32, i32
  }
  func.func @transform_1(%arg0: i32, %arg1: i32) -> (i32, i32) {
    %c0_i32 = arith.constant 0 : i32
    return %arg0, %arg1 : i32, i32
  }
}

</mosaic_0001>

<llo_original>
// kernel: tpu_custom_call.1
$region0: #{tpu_custom_call.1}
  #allocation0 [shape = 'u32[]', space=smem, size = 0x4, offset = 0x4, fixed_abs, tag = 'smem constant byte address 0x4 - core index']
  #allocation1 [shape = 'u32[144,128]{1,0:T(1,128)}', space=vmem, size = 0x12000, scoped, tag = 'internal scratch']
  #allocation2 [shape = 'f32[8,1]{1,0:T(8,128)}', space=vmem, size = 0x1000, scoped, tag = 'scratch operand']
  %s0 = inlined_call_operand.hbm [shape: f32[8,2048], index: 0, kind: input, shape index: {}]
  %s1 = inlined_call_operand.hbm [shape: f32[8,2048], index: 1, kind: output, shape index: {}]
  %s2 = sld [smem:[#allocation0]]
  $region45: #{tpu_custom_call.1} parent=0
    _
  %s4 = ssub.s32 1, %s2
  %s5 = scalar_select 0, %s4, %s2
  $region1: #{tpu_custom_call.1} parent=0
    #allocation3 [shape = 'u8[32768]{0}', space=vmem, size = 0x8000, scoped, tag = 'input window, operand 0']
    #allocation4 [shape = 's32[2]{0}', space=sflag, size = 0x8, scoped, tag = 'scoped memory for tpu_custom_call.1']
    #allocation5 [shape = 's32[2]{0}', space=sflag, size = 0x8, scoped, tag = 'scoped memory for tpu_custom_call.1']
    #allocation6 [shape = 'u8[32768]{0}', space=vmem, size = 0x8000, scoped, tag = 'output window, operand 0']
    %6 = vsyncpa [#allocation4], 0
    %s7 = scalar_lea.sflag [#allocation4], 1
    %8 = vsyncpa %s7, 0
    %9 = vsyncpa [#allocation5], 0
    %s10 = scalar_lea.sflag [#allocation5], 1
    %11 = vsyncpa %s10, 0
    loop: start=0, step=1, limit=6
    $region2: #{tpu_custom_call.1} parent=1 // loop_pre_header
      _
    $region3: #{tpu_custom_call.1} parent=1 // loop_header
      %s13 = sphi 0, %s17
      %p14 = scmp.ge.s32.totalorder %s13, 6
      %s20 = sphi 0, %s32
      %s21 = sphi 0, %s28
      %s22 = sphi 0, %s20
      %s23 = sphi 0, %s21
      %s24 = sphi 0, %s22
      %s25 = sphi 0, %s23
      %s37 = sphi 0, %s39
      %s40 = sphi 0, %s37
      %s41 = sphi 0, %s40
      %s57 = sphi 0, %s41
      %s65 = sphi 0, %s67
      %s68 = sphi 0, %s65
      %s69 = sphi 0, %s68
      %s85 = sphi 0, %s69
    $region4: #{tpu_custom_call.1} parent=1 // loop_header_branch
      %16 = sbr.rel (%p14) target = $region8
    $region5: #{tpu_custom_call.1} parent=1 // loop_body
      %s18 = ssub.s32 %s13, 1
      %s19 = ssub.s32 %s13, 2
      %s26 = sadd.s32 1, %s21
      %p27 = scmp.ge.s32.totalorder %s26, 4
      %s28 = scalar_select %p27, 0, %s26
      %s29 = sadd.s32 1, %s20
      %s30 = scalar_select %p27, %s29, %s20
      %p31 = scmp.ge.s32.totalorder %s30, 1
      %s32 = scalar_select %p31, 0, %s30
      %s33 = ssub.s32 %s20, %s32
      %s34 = ssub.s32 %s21, %s28
      %s35 = sor.u32 %s33, %s34
      %p36 = scmp.eq.s32.totalorder %s35, 0
      %s38 = sadd.s32 %s37, 1
      %s39 = scalar_select %p36, %s37, %s38
      %p42 = pneg %p36
      %p43 = scmp.eq.s32.totalorder %s13, 3
      %p44 = por %p42, %p43
      %p45 = scmp.ne.s32.totalorder %s37, %s40
      %p46 = scmp.eq.s32.totalorder %s13, 0
      %p47 = por %p45, %p46
      %p48 = scmp.ne.s32.totalorder %s37, %s40
      %p49 = scmp.eq.s32.totalorder %s18, 3
      %p50 = por %p48, %p49
      %p51 = scmp.ne.s32.totalorder %s40, %s41
      %p52 = scmp.eq.s32.totalorder %s18, 0
      %p53 = por %p51, %p52
      %p54 = scmp.ne.s32.totalorder %s40, %s41
      %p55 = scmp.eq.s32.totalorder %s19, 3
      %p56 = por %p54, %p55
      %p58 = scmp.ne.s32.totalorder %s41, %s57
      %p59 = scmp.eq.s32.totalorder %s19, 0
      %p60 = por %p58, %p59
      %s61 = ssub.s32 %s20, %s32
      %s62 = ssub.s32 %s21, %s28
      %s63 = sor.u32 %s61, %s62
      %p64 = scmp.eq.s32.totalorder %s63, 0
      %s66 = sadd.s32 %s65, 1
      %s67 = scalar_select %p64, %s65, %s66
      %p70 = pneg %p64
      %p71 = scmp.eq.s32.totalorder %s13, 3
      %p72 = por %p70, %p71
      %p73 = scmp.ne.s32.totalorder %s65, %s68
      %p74 = scmp.eq.s32.totalorder %s13, 0
      %p75 = por %p73, %p74
      %p76 = scmp.ne.s32.totalorder %s65, %s68
      %p77 = scmp.eq.s32.totalorder %s18, 3
      %p78 = por %p76, %p77
      %p79 = scmp.ne.s32.totalorder %s68, %s69
      %p80 = scmp.eq.s32.totalorder %s18, 0
      %p81 = por %p79, %p80
      %p82 = scmp.ne.s32.totalorder %s68, %s69
      %p83 = scmp.eq.s32.totalorder %s19, 3
      %p84 = por %p82, %p83
      %p86 = scmp.ne.s32.totalorder %s69, %s85
      %p87 = scmp.eq.s32.totalorder %s19, 0
      %p88 = por %p86, %p87
      %p89 = scmp.le.s32.totalorder 1, %s13
      %p90 = scmp.lt.s32.totalorder %s13, 5
      %p91 = pnand %p89, %p90
      %p92 = pneg %p91
      // Predicated region
      $region9: #{tpu_custom_call.1} parent=5 // pred_check
        _
      $region10: #{tpu_custom_call.1} parent=5 // pred_check_branch
        %94 = sbr.rel (%p91) target = $region12
      $region11: #{tpu_custom_call.1} parent=5 // pred_region
        %s95 = ssub.s32 %s13, 1
      $region12: #{tpu_custom_call.1} parent=5 // pred_fallthru
        _
      %p96 = scmp.lt.s32.totalorder %s13, 4
      // Predicated region
      $region13: #{tpu_custom_call.1} parent=5 // pred_check
        %p97 = pneg %p96
      $region14: #{tpu_custom_call.1} parent=5 // pred_check_branch
        %99 = sbr.rel (%p97) target = $region16
      $region15: #{tpu_custom_call.1} parent=5 // pred_region
        // Predicated region
        $region17: #{tpu_custom_call.1} parent=15 // pred_check
          %p100 = pneg %p47
        $region18: #{tpu_custom_call.1} parent=15 // pred_check_branch
          %102 = sbr.rel (%p100) target = $region20
        $region19: #{tpu_custom_call.1} parent=15 // pred_region
          %s103 = sand.u32 %s37, 1
          %s104 = scalar_lea.sflag [#allocation4], %s103
          %s105 = sand.u32 %s37, 1
          %s106 = smul.addr %s105, 32
          %s107 = scalar_lea.vmem [#allocation3], %s106
          %s108 = smul.u32 4, %s21
          %s110 = ssub.s32 512, 512
          %111 = vsyncadd %s104, %s110
          %s112 = smul.addr %s20, 16
          %s113 = sadd.s32 %s108, %s112
          %s114 = smul.addr %s113, 128
          %s115 = scalar_lea.hbm %s0, %s114
          %s117 = sshll.u32 %s107, 4
          %s118 = int_to_ptr.vmem [resolvable:$true] %s117
          %120 = dma.hbm_to_vmem [thread:$0]  %s115, 512, %s118, %s104
        $region20: #{tpu_custom_call.1} parent=15 // pred_fallthru
          _
      $region16: #{tpu_custom_call.1} parent=5 // pred_fallthru
        _
      %p121 = scmp.le.s32.totalorder 1, %s13
      %p122 = scmp.lt.s32.totalorder %s13, 5
      %p123 = pnand %p121, %p122
      %p124 = pneg %p123
      // Predicated region
      $region21: #{tpu_custom_call.1} parent=5 // pred_check
        _
      $region22: #{tpu_custom_call.1} parent=5 // pred_check_branch
        %126 = sbr.rel (%p123) target = $region24
      $region23: #{tpu_custom_call.1} parent=5 // pred_region
        %s127 = ssub.s32 %s13, 1
        %s128 = sand.u32 %s40, 1
        %s129 = scalar_lea.sflag [#allocation4], %s128
        %s130 = sand.u32 %s40, 1
        %s131 = smul.addr %s130, 32
        %s132 = scalar_lea.vmem [#allocation3], %s131
        // Predicated region
        $region25: #{tpu_custom_call.1} parent=23 // pred_check
          %p133 = pneg %p53
        $region26: #{tpu_custom_call.1} parent=23 // pred_check_branch
          %135 = sbr.rel (%p133) target = $region28
        $region27: #{tpu_custom_call.1} parent=23 // pred_region
          %136 = dma.done %s129, 512
        $region28: #{tpu_custom_call.1} parent=23 // pred_fallthru
          _
        %s137 = sand.u32 %s40, 1
        %s138 = scalar_lea.sflag [#allocation4], %s137
        %s139 = sand.u32 %s40, 1
        %s140 = smul.addr %s139, 32
        %s141 = scalar_lea.vmem [#allocation3], %s140
        %p142 = pneg %p53
        %p143 = pneg %p50
        %p144 = pneg %p81
        %p145 = pneg %p78
        %s146 = sand.u32 %s68, 1
        %s147 = scalar_lea.sflag [#allocation5], %s146
        %s148 = sand.u32 %s68, 1
        %s149 = smul.addr %s148, 32
        %s150 = scalar_lea.vmem [#allocation6], %s149
        %s151 = smul.u32 4, %s23
        %s152 = smul.u32 4, %s23
        %v153 = vld [vmem:[%s132] sm:$0xff]
        %v154 = vld [vmem:[%s132 + $0x8] sm:$0xff]
        %v155 = vld [vmem:[%s132 + $0x10] sm:$0xff]
        %v156 = vld [vmem:[%s132 + $0x18] sm:$0xff]
        %p157 = scmp.eq.s32.totalorder %s23, 0
        // Predicated region
        $region29: #{tpu_custom_call.1} parent=23 // pred_check
          %p158 = pneg %p157
        $region30: #{tpu_custom_call.1} parent=23 // pred_check_branch
          %160 = sbr.rel (%p158) target = $region32
        $region31: #{tpu_custom_call.1} parent=23 // pred_region
          %162 = vrot.lane.b32.xlu0 %v153, 127
          %v163 = vpop.permute.xlu0 %162
          %vm165 = vcmask 7168
          %166 = vst.msk [vmem:[#allocation2] sm:$0xff] %vm165, %v163
        $region32: #{tpu_custom_call.1} parent=23 // pred_fallthru
          _
        %v167 = vld [vmem:[#allocation2] sm:$0xff]
        %168 = vrot.lane.b32.xlu0 %v153, 1
        %v169 = vpop.permute.xlu0 %168
        %170 = vrot.lane.b32.xlu0 %v154, 1
        %v171 = vpop.permute.xlu0 %170
        %172 = vrot.lane.b32.xlu0 %v155, 1
        %v173 = vpop.permute.xlu0 %172
        %174 = vrot.lane.b32.xlu0 %v156, 1
        %v175 = vpop.permute.xlu0 %174
        %v176 = vlaneseq
        %v177 = vand.u32 %v176, 127
        %vm178 = vcmp.lt.s32.totalorder %v177, 1
        %v179 = vsel %vm178, %v173, %v175
        %v180 = vsel %vm178, %v171, %v173
        %v181 = vsel %vm178, %v169, %v171
        %v182 = vsel %vm178, %v175, %v169
        %v183 = vmul.f32 %v182, 0.97
        %v184 = vmul.f32 %v181, 0.97
        %v185 = vmul.f32 %v180, 0.97
        %v186 = vmul.f32 %v179, 0.97
        %v187 = vsub.f32 %v153, %v183
        %v188 = vsub.f32 %v154, %v184
        %v189 = vsub.f32 %v155, %v185
        %v190 = vsub.f32 %v156, %v186
        %191 = vst [vmem:[%s150] sm:$0xff] %v187
        %192 = vst [vmem:[%s150 + $0x8] sm:$0xff] %v188
        %193 = vst [vmem:[%s150 + $0x10] sm:$0xff] %v189
        %194 = vst [vmem:[%s150 + $0x18] sm:$0xff] %v190
        %v195 = vmul.f32 %v167, 0.97
        %v196 = vsub.f32 %v153, %v195
        %vm197 = vcmask 7168
        %198 = vst.msk [vmem:[%s150] sm:$0xff] %vm197, %v196
        %200 = vrot.lane.b32.xlu0 %v156, 1
        %v201 = vpop.permute.xlu0 %200
        %203 = vst.msk [vmem:[#allocation2] sm:$0xff] %vm197, %v201
        %s204 = sand.u32 %s68, 1
        %s205 = scalar_lea.sflag [#allocation5], %s204
        %s206 = sand.u32 %s68, 1
        %s207 = smul.addr %s206, 32
        %s208 = scalar_lea.vmem [#allocation6], %s207
        // Predicated region
        $region33: #{tpu_custom_call.1} parent=23 // pred_check
          %p209 = pneg %p78
        $region34: #{tpu_custom_call.1} parent=23 // pred_check_branch
          %211 = sbr.rel (%p209) target = $region36
        $region35: #{tpu_custom_call.1} parent=23 // pred_region
          %s212 = smul.u32 4, %s23
          %s214 = ssub.s32 512, 512
          %215 = vsyncadd %s205, %s214
          %s216 = smul.addr %s22, 16
          %s217 = sadd.s32 %s212, %s216
          %s218 = smul.addr %s217, 128
          %s219 = scalar_lea.hbm %s1, %s218
          %s221 = sshll.u32 %s208, 4
          %s222 = int_to_ptr.vmem [resolvable:$true] %s221
          %224 = dma.vmem_to_hbm [thread:$0]  %s222, 512, %s219, %s205
        $region36: #{tpu_custom_call.1} parent=23 // pred_fallthru
          _
      $region24: #{tpu_custom_call.1} parent=5 // pred_fallthru
        _
      %p225 = scmp.le.s32.totalorder 2, %s13
      // Predicated region
      $region37: #{tpu_custom_call.1} parent=5 // pred_check
        %p226 = pneg %p225
      $region38: #{tpu_custom_call.1} parent=5 // pred_check_branch
        %228 = sbr.rel (%p226) target = $region40
      $region39: #{tpu_custom_call.1} parent=5 // pred_region
        %s229 = ssub.s32 %s13, 2
        // Predicated region
        $region41: #{tpu_custom_call.1} parent=39 // pred_check
          %p230 = pneg %p84
        $region42: #{tpu_custom_call.1} parent=39 // pred_check_branch
          %232 = sbr.rel (%p230) target = $region44
        $region43: #{tpu_custom_call.1} parent=39 // pred_region
          %s233 = sand.u32 %s69, 1
          %s234 = scalar_lea.sflag [#allocation5], %s233
          %s235 = sand.u32 %s69, 1
          %s236 = smul.addr %s235, 32
          %s237 = scalar_lea.vmem [#allocation6], %s236
          %238 = dma.done %s234, 512
        $region44: #{tpu_custom_call.1} parent=39 // pred_fallthru
          _
      $region40: #{tpu_custom_call.1} parent=5 // pred_fallthru
        _
    $region6: #{tpu_custom_call.1} parent=1 // loop_footer
      %s17 = sadd.s32 1, %s13
    $region7: #{tpu_custom_call.1} parent=1 // loop_footer_branch
      %12 = sbr.rel target = $region3
    $region8: #{tpu_custom_call.1} parent=1 // loop_exit
      _
    %239 = vsyncpa [#allocation4], 1
    %s240 = scalar_lea.sflag [#allocation4], 1
    %241 = vsyncpa %s240, 1
    %242 = vsyncpa [#allocation5], 1
    %s243 = scalar_lea.sflag [#allocation5], 1
    %244 = vsyncpa %s243, 1

</llo_original>
